<compile_context>
chip_gen: v7x
topology: tpu7x:2x2x1
jax: 0.10.0
libtpu: 0.0.40
codegen_flags: <defaults>
</compile_context>

<pallas_src>
import functools

import jax
import jax.numpy as jnp
from jax import lax
from jax.experimental import pallas as pl
from jax.experimental.pallas import tpu as pltpu


_GATHER_VMEM_BUDGET = 24 * 1024 * 1024   # bytes for the double-buffered out block
_MASK_VMEM_BUDGET = 24 * 1024 * 1024
_VMEM_LIMIT_BYTES = 40 * 1024 * 1024     # comfortably under v7x's 64 MiB per TC
_MAX_OUTSTANDING_DMAS = 32


def _round_up(x, m):
    return ((x + m - 1) // m) * m


def _pow2_floor(x):
    p = 1
    while p * 2 <= x:
        p *= 2
    return p


def _pick_block(n, row_bytes, budget, want_two_steps=True):
    """Largest multiple-of-8 block <= 512 whose double buffer fits `budget`."""
    blk = (budget // (2 * row_bytes)) // 8 * 8
    blk = max(8, min(512, blk, _round_up(n, 8)))
    if want_two_steps:
        # Prefer >= 2 grid steps so both v7x TensorCores get work.
        while blk > 8 and _round_up(n, blk) // blk < 2:
            blk = max(8, (blk // 2) // 8 * 8)
    return blk


# --------------------------------------------------------------------------- #
# Kernel 1: embedding row gather via manual DMA from HBM into the out block    #
# --------------------------------------------------------------------------- #
def _gather_kernel(ids_ref, emb_hbm, out_ref, sem, *, vocab, scale, window):
    # ids_ref : (N_pad,) int32 in SMEM (scalar-prefetched flattened token ids)
    # emb_hbm : (V, Dp) embedding table left in HBM (memory_space=pl.ANY)
    # out_ref : (TB, Dp) VMEM output block (auto-pipelined); DMA destination
    # sem     : (window,) DMA semaphores -- bounded rolling window
    tb = out_ref.shape[0]
    base = pl.program_id(0) * tb

    def issue(row, slot):
        tok = ids_ref[base + row]
        # TODO(synk): torch.nn.Embedding raises on out-of-range ids; we clamp.
        tok = jnp.clip(tok, 0, vocab - 1)
        pltpu.make_async_copy(
            emb_hbm.at[pl.ds(tok, 1), :],
            out_ref.at[pl.ds(row, 1), :],
            sem.at[slot],
        ).start()

    # Prime the window (static unroll, <= 32 descriptors).
    for i in range(window):
        issue(i, i)

    # Steady state: wait for row i, then reuse its slot for row i + window.
    def body(i, carry):
        slot = i & (window - 1)
        pltpu.make_async_copy(
            emb_hbm.at[pl.ds(0, 1), :],           # shape-only; sem carries count
            out_ref.at[pl.ds(i, 1), :],
            sem.at[slot],
        ).wait()

        @pl.when(i + window < tb)
        def _():
            issue(i + window, slot)

        return carry

    lax.fori_loop(0, tb, body, 0)

    if scale is not None:  # gemma2 path only; llama/mistral do no VALU work here
        out_ref[...] = out_ref[...] * jnp.asarray(scale, out_ref.dtype)


# --------------------------------------------------------------------------- #
# Kernel 2: eager 4D additive causal + padding mask, tiled over (batch, q)     #
# --------------------------------------------------------------------------- #
def _mask_kernel(attn_ref, mask_ref):
    # attn_ref : (1, 1, S) int32 padding mask for this batch row
    # mask_ref : (1, 1, TQ, S) output tile; full-S k axis stays lane-dense
    tq, s = mask_ref.shape[2], mask_ref.shape[3]
    q0 = pl.program_id(1) * tq

    q_idx = q0 + lax.broadcasted_iota(jnp.int32, (tq, s), 0)
    k_idx = lax.broadcasted_iota(jnp.int32, (tq, s), 1)
    allowed = (k_idx <= q_idx) & (attn_ref[0] != 0)     # (TQ, S)

    dt = mask_ref.dtype
    neg = jnp.asarray(jnp.finfo(dt).min, dt)            # finfo of output dtype
    mask_ref[...] = jnp.where(allowed, jnp.zeros([], dt), neg)[None, None]


# --------------------------------------------------------------------------- #
# Wrapper: full EmbeddingPipe.forward                                          #
# --------------------------------------------------------------------------- #
def embedding_pipe_forward(inputs, emb_table, *, model_type="llama"):
    """JAX/Pallas equivalent of EmbeddingPipe.forward.

    inputs = (input_ids(B,S) int, attention_mask(B,S) int,
              position_ids or None, labels or None)
    """
    input_ids, attention_mask, position_ids, labels = inputs
    B, S = input_ids.shape
    V, D = emb_table.shape
    out_dtype = emb_table.dtype
    itemsize = emb_table.dtype.itemsize
    N = B * S

    # gemma2 multiplies hidden states by sqrt(hidden_size); llama/mistral do not.
    scale = float(D) ** 0.5 if model_type == "gemma2" else None

    # ---- 1) Embedding gather: table stays in HBM, ids scalar-prefetched. ----
    # For 2-byte tables, gather packed uint32 rows so every row DMA writes full
    # 32-bit words into the (TB, Dp) VMEM tile.
    packed = itemsize == 2 and D % 2 == 0
    if packed:
        dp = D // 2
        table_view = jax.lax.bitcast_convert_type(
            emb_table.reshape(V, dp, 2), jnp.uint32)      # (V, Dp) uint32
        gather_dtype = jnp.uint32
        row_bytes = dp * 4
    else:
        dp = D
        table_view = emb_table
        gather_dtype = out_dtype
        row_bytes = D * itemsize

    TB = _pick_block(N, row_bytes, _GATHER_VMEM_BUDGET)
    N_pad = _round_up(N, TB)
    window = _pow2_floor(min(_MAX_OUTSTANDING_DMAS, TB))

    ids_flat = input_ids.reshape(N).astype(jnp.int32)
    if N_pad != N:
        ids_flat = jnp.pad(ids_flat, (0, N_pad - N))      # id-0 rows, discarded

    gather_cost = pl.CostEstimate(
        flops=0, transcendentals=0,
        bytes_accessed=int(2 * N_pad * row_bytes + N_pad * 4))

    hidden_flat = pl.pallas_call(
        functools.partial(
            _gather_kernel, vocab=V, window=window,
            scale=(scale if not packed else None)),
        out_shape=jax.ShapeDtypeStruct((N_pad, dp), gather_dtype),
        grid_spec=pltpu.PrefetchScalarGridSpec(
            num_scalar_prefetch=1,
            grid=(N_pad // TB,),
            in_specs=[pl.BlockSpec(memory_space=pl.ANY)],   # table stays in HBM
            out_specs=pl.BlockSpec((TB, dp), lambda t, ids: (t, 0)),
            scratch_shapes=[pltpu.SemaphoreType.DMA((window,))],
        ),
        compiler_params=pltpu.CompilerParams(
            dimension_semantics=("parallel",),
            vmem_limit_bytes=_VMEM_LIMIT_BYTES),
        cost_estimate=gather_cost,
    )(ids_flat, table_view)

    if packed:
        hidden_flat = jax.lax.bitcast_convert_type(hidden_flat, out_dtype)
        hidden_flat = hidden_flat.reshape(N_pad, D)
        if scale is not None:  # gemma2 normalizer on the packed path
            hidden_flat = hidden_flat * jnp.asarray(scale, out_dtype)
    hidden_states = hidden_flat[:N].reshape(B, S, D)

    # ---- 3) Eager 4D additive causal + padding mask, tiled over (batch, q). ----
    # TODO(synk): HF's SDPA/flash "return None mask" short-circuit and mistral
    # sliding-window masking have no analog here; the eager 4D mask is emitted.
    TQ = _pick_block(S, S * itemsize, _MASK_VMEM_BUDGET, want_two_steps=False)
    Sq_pad = _round_up(S, TQ)

    attn3 = attention_mask.reshape(B, 1, S).astype(jnp.int32)
    mask_cost = pl.CostEstimate(
        flops=0, transcendentals=0,
        bytes_accessed=int(B * Sq_pad * S * itemsize + B * S * 4))

    causal_mask = pl.pallas_call(
        _mask_kernel,
        out_shape=jax.ShapeDtypeStruct((B, 1, Sq_pad, S), out_dtype),
        grid=(B, Sq_pad // TQ),
        in_specs=[pl.BlockSpec((1, 1, S), lambda b, q: (b, 0, 0))],
        out_specs=pl.BlockSpec((1, 1, TQ, S), lambda b, q: (b, 0, q, 0)),
        compiler_params=pltpu.CompilerParams(
            dimension_semantics=("parallel", "parallel"),
            vmem_limit_bytes=_VMEM_LIMIT_BYTES),
        cost_estimate=mask_cost,
    )(attn3)
    if Sq_pad != S:
        causal_mask = causal_mask[:, :, :S, :]

    # ---- 2) position_ids = arange(S)[None, :] (trivial; wrapper-side). ----
    if position_ids is None:
        position_ids = jnp.arange(S, dtype=jnp.int32)[None, :]

    # TODO(synk): embedding_on_cpu device placement, past_key_values cache, and
    # requires_grad_ bookkeeping have no Pallas analog (forward-only here).
    return hidden_states, causal_mask, position_ids, labels


if __name__ == "__main__":
    key = jax.random.PRNGKey(0)
    B, S, V, D = 2, 8, 64, 128   # batch, seq, vocab, hidden

    k_emb, k_ids = jax.random.split(key)
    emb_table = jax.random.normal(k_emb, (V, D), dtype=jnp.float32) * 0.02
    input_ids = jax.random.randint(k_ids, (B, S), 0, V, dtype=jnp.int32)
    # second sequence has 2 padding tokens at the end
    attention_mask = jnp.array([[1] * S, [1] * (S - 2) + [0, 0]], dtype=jnp.int32)
    labels = input_ids  # pass-through, typical for LM training

    inputs = (input_ids, attention_mask, None, labels)
    hidden, mask4d, pos_ids, labels_out = embedding_pipe_forward(
        inputs, emb_table, model_type="llama")
    jax.block_until_ready((hidden, mask4d, pos_ids))

    # --- pure-JAX reference check (f32 / llama path) --------------------------
    ref_hidden = jnp.take(emb_table, input_ids, axis=0)
    q = jnp.arange(S)[:, None]
    k = jnp.arange(S)[None, :]
    allowed = (k <= q)[None, None] & (attention_mask != 0)[:, None, None, :]
    ref_mask = jnp.where(allowed, 0.0, jnp.finfo(jnp.float32).min)
    ref_pos = jnp.arange(S, dtype=jnp.int32)[None, :]

    assert hidden.shape == (B, S, D)
    assert mask4d.shape == (B, 1, S, S)
    assert pos_ids.shape == (1, S)
    assert jnp.allclose(hidden, ref_hidden, atol=1e-6)
    assert jnp.allclose(mask4d, ref_mask)
    assert jnp.array_equal(pos_ids, ref_pos)
    assert jnp.array_equal(labels_out, labels)

    # --- bf16 table exercises the packed-uint32 gather + gemma2 scale ---------
    emb_bf16 = emb_table.astype(jnp.bfloat16)
    hid_bf, mask_bf, _, _ = embedding_pipe_forward(
        (input_ids, attention_mask, None, labels), emb_bf16, model_type="gemma2")
    jax.block_until_ready((hid_bf, mask_bf))
    ref_bf = jnp.take(emb_bf16, input_ids, axis=0) * jnp.asarray(
        float(D) ** 0.5, jnp.bfloat16)
    assert hid_bf.shape == (B, S, D) and hid_bf.dtype == jnp.bfloat16
    assert jnp.allclose(hid_bf.astype(jnp.float32), ref_bf.astype(jnp.float32),
                        rtol=1e-2, atol=1e-2)
    assert mask_bf.shape == (B, 1, S, S) and mask_bf.dtype == jnp.bfloat16

    print("KERNEL_OK")
</pallas_src>

<mosaic_0001>
module attributes {stable_mosaic.version = 11 : i64} {
  func.func @_gather_kernel(%arg0: i32, %arg1: memref<16xi32, #tpu.memory_space<smem>>, %arg2: memref<64x128xf32, #tpu.memory_space<any>>, %arg3: memref<8x128xf32, #tpu.memory_space<vmem>>, %arg4: memref<8x!tpu.dma_semaphore, #tpu.memory_space<semaphore_mem>>) attributes {dimension_semantics = [#tpu.dimension_semantics<parallel>], iteration_bounds = array<i64: 2>, scalar_prefetch = 1 : i64, scratch_operands = 1 : i64, tpu.core_type = #tpu.core_type<tc>, window_params = [{}, {transform_indices = @transform_1, window_bounds = array<i64: 8, 128>}]} {
    %c8_i32 = arith.constant 8 : i32
    %0 = arith.muli %arg0, %c8_i32 : i32
    %c0_i32 = arith.constant 0 : i32
    %1 = arith.addi %0, %c0_i32 : i32
    %2 = arith.index_cast %1 : i32 to index
    %3 = memref.load %arg1[%2] : memref<16xi32, #tpu.memory_space<smem>>
    %c0_i32_0 = arith.constant 0 : i32
    %c63_i32 = arith.constant 63 : i32
    %4 = arith.maxsi %c0_i32_0, %3 : i32
    %5 = arith.minsi %c63_i32, %4 : i32
    %c0_i32_1 = arith.constant 0 : i32
    %c0_i32_2 = arith.constant 0 : i32
    %6 = tpu.memref_slice %arg2[%5, %c0_i32_2] : memref<64x128xf32, #tpu.memory_space<any>> -> memref<1x128xf32, #tpu.memory_space<any>>
    %c0_i32_3 = arith.constant 0 : i32
    %c0_i32_4 = arith.constant 0 : i32
    %7 = tpu.memref_slice %arg3[%c0_i32_3, %c0_i32_4] : memref<8x128xf32, #tpu.memory_space<vmem>> -> memref<1x128xf32, #tpu.memory_space<vmem>>
    %8 = tpu.memref_slice %arg4[%c0_i32_1] : memref<8x!tpu.dma_semaphore, #tpu.memory_space<semaphore_mem>> -> memref<1x!tpu.dma_semaphore, #tpu.memory_space<semaphore_mem>>
    %9 = tpu.memref_squeeze %8 : memref<1x!tpu.dma_semaphore, #tpu.memory_space<semaphore_mem>> -> memref<!tpu.dma_semaphore, #tpu.memory_space<semaphore_mem>>
    tpu.enqueue_dma source(%6 : memref<1x128xf32, #tpu.memory_space<any>>) target(%7 : memref<1x128xf32, #tpu.memory_space<vmem>>) target_semaphore(%9 : memref<!tpu.dma_semaphore, #tpu.memory_space<semaphore_mem>>)
    %c1_i32 = arith.constant 1 : i32
    %10 = arith.addi %0, %c1_i32 : i32
    %11 = arith.index_cast %10 : i32 to index
    %12 = memref.load %arg1[%11] : memref<16xi32, #tpu.memory_space<smem>>
    %c0_i32_5 = arith.constant 0 : i32
    %c63_i32_6 = arith.constant 63 : i32
    %13 = arith.maxsi %c0_i32_5, %12 : i32
    %14 = arith.minsi %c63_i32_6, %13 : i32
    %c1_i32_7 = arith.constant 1 : i32
    %c0_i32_8 = arith.constant 0 : i32
    %15 = tpu.memref_slice %arg2[%14, %c0_i32_8] : memref<64x128xf32, #tpu.memory_space<any>> -> memref<1x128xf32, #tpu.memory_space<any>>
    %c1_i32_9 = arith.constant 1 : i32
    %c0_i32_10 = arith.constant 0 : i32
    %16 = tpu.memref_slice %arg3[%c1_i32_9, %c0_i32_10] : memref<8x128xf32, #tpu.memory_space<vmem>> -> memref<1x128xf32, #tpu.memory_space<vmem>>
    %17 = tpu.memref_slice %arg4[%c1_i32_7] : memref<8x!tpu.dma_semaphore, #tpu.memory_space<semaphore_mem>> -> memref<1x!tpu.dma_semaphore, #tpu.memory_space<semaphore_mem>>
    %18 = tpu.memref_squeeze %17 : memref<1x!tpu.dma_semaphore, #tpu.memory_space<semaphore_mem>> -> memref<!tpu.dma_semaphore, #tpu.memory_space<semaphore_mem>>
    tpu.enqueue_dma source(%15 : memref<1x128xf32, #tpu.memory_space<any>>) target(%16 : memref<1x128xf32, #tpu.memory_space<vmem>>) target_semaphore(%18 : memref<!tpu.dma_semaphore, #tpu.memory_space<semaphore_mem>>)
    %c2_i32 = arith.constant 2 : i32
    %19 = arith.addi %0, %c2_i32 : i32
    %20 = arith.index_cast %19 : i32 to index
    %21 = memref.load %arg1[%20] : memref<16xi32, #tpu.memory_space<smem>>
    %c0_i32_11 = arith.constant 0 : i32
    %c63_i32_12 = arith.constant 63 : i32
    %22 = arith.maxsi %c0_i32_11, %21 : i32
    %23 = arith.minsi %c63_i32_12, %22 : i32
    %c2_i32_13 = arith.constant 2 : i32
    %c0_i32_14 = arith.constant 0 : i32
    %24 = tpu.memref_slice %arg2[%23, %c0_i32_14] : memref<64x128xf32, #tpu.memory_space<any>> -> memref<1x128xf32, #tpu.memory_space<any>>
    %c2_i32_15 = arith.constant 2 : i32
    %c0_i32_16 = arith.constant 0 : i32
    %25 = tpu.memref_slice %arg3[%c2_i32_15, %c0_i32_16] : memref<8x128xf32, #tpu.memory_space<vmem>> -> memref<1x128xf32, #tpu.memory_space<vmem>>
    %26 = tpu.memref_slice %arg4[%c2_i32_13] : memref<8x!tpu.dma_semaphore, #tpu.memory_space<semaphore_mem>> -> memref<1x!tpu.dma_semaphore, #tpu.memory_space<semaphore_mem>>
    %27 = tpu.memref_squeeze %26 : memref<1x!tpu.dma_semaphore, #tpu.memory_space<semaphore_mem>> -> memref<!tpu.dma_semaphore, #tpu.memory_space<semaphore_mem>>
    tpu.enqueue_dma source(%24 : memref<1x128xf32, #tpu.memory_space<any>>) target(%25 : memref<1x128xf32, #tpu.memory_space<vmem>>) target_semaphore(%27 : memref<!tpu.dma_semaphore, #tpu.memory_space<semaphore_mem>>)
    %c3_i32 = arith.constant 3 : i32
    %28 = arith.addi %0, %c3_i32 : i32
    %29 = arith.index_cast %28 : i32 to index
    %30 = memref.load %arg1[%29] : memref<16xi32, #tpu.memory_space<smem>>
    %c0_i32_17 = arith.constant 0 : i32
    %c63_i32_18 = arith.constant 63 : i32
    %31 = arith.maxsi %c0_i32_17, %30 : i32
    %32 = arith.minsi %c63_i32_18, %31 : i32
    %c3_i32_19 = arith.constant 3 : i32
    %c0_i32_20 = arith.constant 0 : i32
    %33 = tpu.memref_slice %arg2[%32, %c0_i32_20] : memref<64x128xf32, #tpu.memory_space<any>> -> memref<1x128xf32, #tpu.memory_space<any>>
    %c3_i32_21 = arith.constant 3 : i32
    %c0_i32_22 = arith.constant 0 : i32
    %34 = tpu.memref_slice %arg3[%c3_i32_21, %c0_i32_22] : memref<8x128xf32, #tpu.memory_space<vmem>> -> memref<1x128xf32, #tpu.memory_space<vmem>>
    %35 = tpu.memref_slice %arg4[%c3_i32_19] : memref<8x!tpu.dma_semaphore, #tpu.memory_space<semaphore_mem>> -> memref<1x!tpu.dma_semaphore, #tpu.memory_space<semaphore_mem>>
    %36 = tpu.memref_squeeze %35 : memref<1x!tpu.dma_semaphore, #tpu.memory_space<semaphore_mem>> -> memref<!tpu.dma_semaphore, #tpu.memory_space<semaphore_mem>>
    tpu.enqueue_dma source(%33 : memref<1x128xf32, #tpu.memory_space<any>>) target(%34 : memref<1x128xf32, #tpu.memory_space<vmem>>) target_semaphore(%36 : memref<!tpu.dma_semaphore, #tpu.memory_space<semaphore_mem>>)
    %c4_i32 = arith.constant 4 : i32
    %37 = arith.addi %0, %c4_i32 : i32
    %38 = arith.index_cast %37 : i32 to index
    %39 = memref.load %arg1[%38] : memref<16xi32, #tpu.memory_space<smem>>
    %c0_i32_23 = arith.constant 0 : i32
    %c63_i32_24 = arith.constant 63 : i32
    %40 = arith.maxsi %c0_i32_23, %39 : i32
    %41 = arith.minsi %c63_i32_24, %40 : i32
    %c4_i32_25 = arith.constant 4 : i32
    %c0_i32_26 = arith.constant 0 : i32
    %42 = tpu.memref_slice %arg2[%41, %c0_i32_26] : memref<64x128xf32, #tpu.memory_space<any>> -> memref<1x128xf32, #tpu.memory_space<any>>
    %c4_i32_27 = arith.constant 4 : i32
    %c0_i32_28 = arith.constant 0 : i32
    %43 = tpu.memref_slice %arg3[%c4_i32_27, %c0_i32_28] : memref<8x128xf32, #tpu.memory_space<vmem>> -> memref<1x128xf32, #tpu.memory_space<vmem>>
    %44 = tpu.memref_slice %arg4[%c4_i32_25] : memref<8x!tpu.dma_semaphore, #tpu.memory_space<semaphore_mem>> -> memref<1x!tpu.dma_semaphore, #tpu.memory_space<semaphore_mem>>
    %45 = tpu.memref_squeeze %44 : memref<1x!tpu.dma_semaphore, #tpu.memory_space<semaphore_mem>> -> memref<!tpu.dma_semaphore, #tpu.memory_space<semaphore_mem>>
    tpu.enqueue_dma source(%42 : memref<1x128xf32, #tpu.memory_space<any>>) target(%43 : memref<1x128xf32, #tpu.memory_space<vmem>>) target_semaphore(%45 : memref<!tpu.dma_semaphore, #tpu.memory_space<semaphore_mem>>)
    %c5_i32 = arith.constant 5 : i32
    %46 = arith.addi %0, %c5_i32 : i32
    %47 = arith.index_cast %46 : i32 to index
    %48 = memref.load %arg1[%47] : memref<16xi32, #tpu.memory_space<smem>>
    %c0_i32_29 = arith.constant 0 : i32
    %c63_i32_30 = arith.constant 63 : i32
    %49 = arith.maxsi %c0_i32_29, %48 : i32
    %50 = arith.minsi %c63_i32_30, %49 : i32
    %c5_i32_31 = arith.constant 5 : i32
    %c0_i32_32 = arith.constant 0 : i32
    %51 = tpu.memref_slice %arg2[%50, %c0_i32_32] : memref<64x128xf32, #tpu.memory_space<any>> -> memref<1x128xf32, #tpu.memory_space<any>>
    %c5_i32_33 = arith.constant 5 : i32
    %c0_i32_34 = arith.constant 0 : i32
    %52 = tpu.memref_slice %arg3[%c5_i32_33, %c0_i32_34] : memref<8x128xf32, #tpu.memory_space<vmem>> -> memref<1x128xf32, #tpu.memory_space<vmem>>
    %53 = tpu.memref_slice %arg4[%c5_i32_31] : memref<8x!tpu.dma_semaphore, #tpu.memory_space<semaphore_mem>> -> memref<1x!tpu.dma_semaphore, #tpu.memory_space<semaphore_mem>>
    %54 = tpu.memref_squeeze %53 : memref<1x!tpu.dma_semaphore, #tpu.memory_space<semaphore_mem>> -> memref<!tpu.dma_semaphore, #tpu.memory_space<semaphore_mem>>
    tpu.enqueue_dma source(%51 : memref<1x128xf32, #tpu.memory_space<any>>) target(%52 : memref<1x128xf32, #tpu.memory_space<vmem>>) target_semaphore(%54 : memref<!tpu.dma_semaphore, #tpu.memory_space<semaphore_mem>>)
    %c6_i32 = arith.constant 6 : i32
    %55 = arith.addi %0, %c6_i32 : i32
    %56 = arith.index_cast %55 : i32 to index
    %57 = memref.load %arg1[%56] : memref<16xi32, #tpu.memory_space<smem>>
    %c0_i32_35 = arith.constant 0 : i32
    %c63_i32_36 = arith.constant 63 : i32
    %58 = arith.maxsi %c0_i32_35, %57 : i32
    %59 = arith.minsi %c63_i32_36, %58 : i32
    %c6_i32_37 = arith.constant 6 : i32
    %c0_i32_38 = arith.constant 0 : i32
    %60 = tpu.memref_slice %arg2[%59, %c0_i32_38] : memref<64x128xf32, #tpu.memory_space<any>> -> memref<1x128xf32, #tpu.memory_space<any>>
    %c6_i32_39 = arith.constant 6 : i32
    %c0_i32_40 = arith.constant 0 : i32
    %61 = tpu.memref_slice %arg3[%c6_i32_39, %c0_i32_40] : memref<8x128xf32, #tpu.memory_space<vmem>> -> memref<1x128xf32, #tpu.memory_space<vmem>>
    %62 = tpu.memref_slice %arg4[%c6_i32_37] : memref<8x!tpu.dma_semaphore, #tpu.memory_space<semaphore_mem>> -> memref<1x!tpu.dma_semaphore, #tpu.memory_space<semaphore_mem>>
    %63 = tpu.memref_squeeze %62 : memref<1x!tpu.dma_semaphore, #tpu.memory_space<semaphore_mem>> -> memref<!tpu.dma_semaphore, #tpu.memory_space<semaphore_mem>>
    tpu.enqueue_dma source(%60 : memref<1x128xf32, #tpu.memory_space<any>>) target(%61 : memref<1x128xf32, #tpu.memory_space<vmem>>) target_semaphore(%63 : memref<!tpu.dma_semaphore, #tpu.memory_space<semaphore_mem>>)
    %c7_i32 = arith.constant 7 : i32
    %64 = arith.addi %0, %c7_i32 : i32
    %65 = arith.index_cast %64 : i32 to index
    %66 = memref.load %arg1[%65] : memref<16xi32, #tpu.memory_space<smem>>
    %c0_i32_41 = arith.constant 0 : i32
    %c63_i32_42 = arith.constant 63 : i32
    %67 = arith.maxsi %c0_i32_41, %66 : i32
    %68 = arith.minsi %c63_i32_42, %67 : i32
    %c7_i32_43 = arith.constant 7 : i32
    %c0_i32_44 = arith.constant 0 : i32
    %69 = tpu.memref_slice %arg2[%68, %c0_i32_44] : memref<64x128xf32, #tpu.memory_space<any>> -> memref<1x128xf32, #tpu.memory_space<any>>
    %c7_i32_45 = arith.constant 7 : i32
    %c0_i32_46 = arith.constant 0 : i32
    %70 = tpu.memref_slice %arg3[%c7_i32_45, %c0_i32_46] : memref<8x128xf32, #tpu.memory_space<vmem>> -> memref<1x128xf32, #tpu.memory_space<vmem>>
    %71 = tpu.memref_slice %arg4[%c7_i32_43] : memref<8x!tpu.dma_semaphore, #tpu.memory_space<semaphore_mem>> -> memref<1x!tpu.dma_semaphore, #tpu.memory_space<semaphore_mem>>
    %72 = tpu.memref_squeeze %71 : memref<1x!tpu.dma_semaphore, #tpu.memory_space<semaphore_mem>> -> memref<!tpu.dma_semaphore, #tpu.memory_space<semaphore_mem>>
    tpu.enqueue_dma source(%69 : memref<1x128xf32, #tpu.memory_space<any>>) target(%70 : memref<1x128xf32, #tpu.memory_space<vmem>>) target_semaphore(%72 : memref<!tpu.dma_semaphore, #tpu.memory_space<semaphore_mem>>)
    %c0_i32_47 = arith.constant 0 : i32
    %c8_i32_48 = arith.constant 8 : i32
    %73 = arith.addi %c0_i32_47, %c8_i32_48 : i32
    %c1_i32_49 = arith.constant 1 : i32
    scf.for %arg5 = %c0_i32_47 to %73 step %c1_i32_49  : i32 {
      %c7_i32_51 = arith.constant 7 : i32
      %74 = arith.andi %arg5, %c7_i32_51 : i32
      %c0_i32_52 = arith.constant 0 : i32
      %c0_i32_53 = arith.constant 0 : i32
      %75 = tpu.memref_slice %arg2[%c0_i32_52, %c0_i32_53] : memref<64x128xf32, #tpu.memory_space<any>> -> memref<1x128xf32, #tpu.memory_space<any>>
      %c0_i32_54 = arith.constant 0 : i32
      %76 = tpu.memref_slice %arg3[%arg5, %c0_i32_54] : memref<8x128xf32, #tpu.memory_space<vmem>> -> memref<1x128xf32, #tpu.memory_space<vmem>>
      %77 = tpu.memref_slice %arg4[%74] : memref<8x!tpu.dma_semaphore, #tpu.memory_space<semaphore_mem>> -> memref<1x!tpu.dma_semaphore, #tpu.memory_space<semaphore_mem>>
      %78 = tpu.memref_squeeze %77 : memref<1x!tpu.dma_semaphore, #tpu.memory_space<semaphore_mem>> -> memref<!tpu.dma_semaphore, #tpu.memory_space<semaphore_mem>>
      tpu.wait_dma2 semaphore(%78 : memref<!tpu.dma_semaphore, #tpu.memory_space<semaphore_mem>>) src(%75 : memref<1x128xf32, #tpu.memory_space<any>>) dst(%76 : memref<1x128xf32, #tpu.memory_space<vmem>>)
      %c8_i32_55 = arith.constant 8 : i32
      %79 = arith.addi %arg5, %c8_i32_55 : i32
      %c8_i32_56 = arith.constant 8 : i32
      %80 = arith.cmpi slt, %79, %c8_i32_56 : i32
      %81 = arith.extui %80 : i1 to i32
      %c0_i32_57 = arith.constant 0 : i32
      %82 = arith.cmpi ne, %81, %c0_i32_57 : i32
      scf.if %82 {
        %c8_i32_58 = arith.constant 8 : i32
        %83 = arith.addi %arg5, %c8_i32_58 : i32
        %84 = arith.addi %0, %83 : i32
        %85 = arith.index_cast %84 : i32 to index
        %86 = memref.load %arg1[%85] : memref<16xi32, #tpu.memory_space<smem>>
        %c0_i32_59 = arith.constant 0 : i32
        %c63_i32_60 = arith.constant 63 : i32
        %87 = arith.maxsi %c0_i32_59, %86 : i32
        %88 = arith.minsi %c63_i32_60, %87 : i32
        %c0_i32_61 = arith.constant 0 : i32
        %89 = tpu.memref_slice %arg2[%88, %c0_i32_61] : memref<64x128xf32, #tpu.memory_space<any>> -> memref<1x128xf32, #tpu.memory_space<any>>
        %c0_i32_62 = arith.constant 0 : i32
        %90 = tpu.memref_slice %arg3[%83, %c0_i32_62] : memref<8x128xf32, #tpu.memory_space<vmem>> -> memref<1x128xf32, #tpu.memory_space<vmem>>
        %91 = tpu.memref_slice %arg4[%74] : memref<8x!tpu.dma_semaphore, #tpu.memory_space<semaphore_mem>> -> memref<1x!tpu.dma_semaphore, #tpu.memory_space<semaphore_mem>>
        %92 = tpu.memref_squeeze %91 : memref<1x!tpu.dma_semaphore, #tpu.memory_space<semaphore_mem>> -> memref<!tpu.dma_semaphore, #tpu.memory_space<semaphore_mem>>
        tpu.enqueue_dma source(%89 : memref<1x128xf32, #tpu.memory_space<any>>) target(%90 : memref<1x128xf32, #tpu.memory_space<vmem>>) target_semaphore(%92 : memref<!tpu.dma_semaphore, #tpu.memory_space<semaphore_mem>>)
      } else {
      }
    }
    %c8_i32_50 = arith.constant 8 : i32
    return
  }
  func.func @transform_1(%arg0: i32, %arg1: memref<16xi32, #tpu.memory_space<smem>>) -> (i32, i32) {
    %c0_i32 = arith.constant 0 : i32
    %c0_i32_0 = arith.constant 0 : i32
    return %arg0, %c0_i32 : i32, i32
  }
}

</mosaic_0001>

<llo_original>
// kernel: tpu_custom_call.1
$region0: #{tpu_custom_call.1}
  #allocation0 [shape = 'u32[]', space=smem, size = 0x4, offset = 0x4, fixed_abs, tag = 'smem constant byte address 0x4 - core index']
  #allocation1 [shape = 'u32[144,128]{1,0:T(1,128)}', space=vmem, size = 0x12000, scoped, tag = 'internal scratch']
  #allocation2 [shape = 's32[8]{0}', space=sflag, size = 0x20, scoped, tag = 'scratch operand']
  #allocation3 [shape = 's32[1]{0}', space=sflag, size = 0x4, scoped, tag = 'scoped memory for tpu_custom_call.1']
  #allocation4 [shape = 'u8[512]{0}', space=smem, size = 0x200, scoped, tag = 'prefetched SMEM operand 0']
  #allocation7 [shape = 's32[]', space=sflag, size = 0x4, offset = 0, fixed_abs, tag = 'sflag constant byte address 0x0 - dummy sync flag']
  #allocation8 [shape = 's32[]', space=sflag, size = 0x4, offset = 0, fixed_abs, tag = 'sflag constant byte address 0x0 - dummy sync flag']
  #allocation9 [shape = 'u32[]', space=smem, size = 0x4, offset = 0x44, fixed_abs, tag = 'smem constant byte address 0x44 - assertion arg 0']
  #allocation10 [shape = 'u32[]', space=smem, size = 0x4, offset = 0x48, fixed_abs, tag = 'smem constant byte address 0x48 - assertion arg 1']
  #allocation11 [shape = 's32[]', space=sflag, size = 0x4, offset = 0, fixed_abs, tag = 'sflag constant byte address 0x0 - dummy sync flag']
  #allocation12 [shape = 's32[]', space=sflag, size = 0x4, offset = 0, fixed_abs, tag = 'sflag constant byte address 0x0 - dummy sync flag']
  #allocation13 [shape = 's32[]', space=sflag, size = 0x4, offset = 0, fixed_abs, tag = 'sflag constant byte address 0x0 - dummy sync flag']
  #allocation14 [shape = 's32[]', space=sflag, size = 0x4, offset = 0, fixed_abs, tag = 'sflag constant byte address 0x0 - dummy sync flag']
  #allocation15 [shape = 's32[]', space=sflag, size = 0x4, offset = 0, fixed_abs, tag = 'sflag constant byte address 0x0 - dummy sync flag']
  #allocation16 [shape = 's32[]', space=sflag, size = 0x4, offset = 0, fixed_abs, tag = 'sflag constant byte address 0x0 - dummy sync flag']
  #allocation17 [shape = 's32[]', space=sflag, size = 0x4, offset = 0, fixed_abs, tag = 'sflag constant byte address 0x0 - dummy sync flag']
  #allocation18 [shape = 's32[]', space=sflag, size = 0x4, offset = 0, fixed_abs, tag = 'sflag constant byte address 0x0 - dummy sync flag']
  #allocation19 [shape = 's32[]', space=sflag, size = 0x4, offset = 0, fixed_abs, tag = 'sflag constant byte address 0x0 - dummy sync flag']
  #allocation20 [shape = 's32[]', space=sflag, size = 0x4, offset = 0, fixed_abs, tag = 'sflag constant byte address 0x0 - dummy sync flag']
  #allocation21 [shape = 's32[]', space=sflag, size = 0x4, offset = 0, fixed_abs, tag = 'sflag constant byte address 0x0 - dummy sync flag']
  #allocation22 [shape = 's32[]', space=sflag, size = 0x4, offset = 0, fixed_abs, tag = 'sflag constant byte address 0x0 - dummy sync flag']
  #allocation23 [shape = 's32[]', space=sflag, size = 0x4, offset = 0, fixed_abs, tag = 'sflag constant byte address 0x0 - dummy sync flag']
  #allocation24 [shape = 's32[]', space=sflag, size = 0x4, offset = 0, fixed_abs, tag = 'sflag constant byte address 0x0 - dummy sync flag']
  #allocation25 [shape = 's32[]', space=sflag, size = 0x4, offset = 0, fixed_abs, tag = 'sflag constant byte address 0x0 - dummy sync flag']
  #allocation26 [shape = 's32[]', space=sflag, size = 0x4, offset = 0, fixed_abs, tag = 'sflag constant byte address 0x0 - dummy sync flag']
  %s0 = inlined_call_operand.hbm [shape: s32[16], index: 0, kind: input, shape index: {}]
  %s1 = inlined_call_operand.hbm [shape: f32[64,128], index: 1, kind: input, shape index: {}]
  %s2 = inlined_call_operand.hbm [shape: f32[16,128], index: 2, kind: output, shape index: {}]
  %s3 = sld [smem:[#allocation0]]
  $region72: #{tpu_custom_call.1} parent=0
    _
  %s5 = ssub.s32 1, %s3
  %s6 = scalar_select 0, %s5, %s3
  %8 = dma.hbm_to_smem %s0, 16, [#allocation4], [#allocation3]
  %9 = dma.done [#allocation3], 16
  %10 = sfence
  $region1: #{tpu_custom_call.1} parent=0
    #allocation5 [shape = 'u8[8192]{0}', space=vmem, size = 0x2000, scoped, tag = 'output window, operand 0']
    #allocation6 [shape = 's32[2]{0}', space=sflag, size = 0x8, scoped, tag = 'scoped memory for tpu_custom_call.1']
    %11 = vsyncpa [#allocation6], 0
    %s12 = scalar_lea.sflag [#allocation6], 1
    %13 = vsyncpa %s12, 0
    loop: start=0, step=1, limit=3
    $region2: #{tpu_custom_call.1} parent=1 // loop_pre_header
      _
    $region3: #{tpu_custom_call.1} parent=1 // loop_header
      %s15 = sphi 0, %s19
      %p16 = scmp.ge.s32.totalorder %s15, 3
      %s24 = sphi 0, %s26
      %s27 = sphi 0, %s24
      %s37 = sphi 0, %s27
    $region4: #{tpu_custom_call.1} parent=1 // loop_header_branch
      %18 = sbr.rel (%p16) target = $region8
    $region5: #{tpu_custom_call.1} parent=1 // loop_body
      %s20 = ssub.s32 %s15, 1
      %s21 = sadd.s32 %s15, 1
      %s22 = ssub.s32 %s15, %s21
      %p23 = scmp.eq.s32.totalorder %s22, 0
      %s25 = sadd.s32 %s24, 1
      %s26 = scalar_select %p23, %s24, %s25
      %p28 = pneg %p23
      %p29 = scmp.eq.s32.totalorder %s15, 1
      %p30 = por %p28, %p29
      %p31 = scmp.ne.s32.totalorder %s24, %s27
      %p32 = scmp.eq.s32.totalorder %s15, 0
      %p33 = por %p31, %p32
      %p34 = scmp.ne.s32.totalorder %s24, %s27
      %p35 = scmp.eq.s32.totalorder %s20, 1
      %p36 = por %p34, %p35
      %p38 = scmp.ne.s32.totalorder %s27, %s37
      %p39 = scmp.eq.s32.totalorder %s20, 0
      %p40 = por %p38, %p39
      %p41 = scmp.lt.s32.totalorder %s15, 2
      // Predicated region
      $region9: #{tpu_custom_call.1} parent=5 // pred_check
        %p42 = pneg %p41
      $region10: #{tpu_custom_call.1} parent=5 // pred_check_branch
        %44 = sbr.rel (%p42) target = $region12
      $region11: #{tpu_custom_call.1} parent=5 // pred_region
        %p45 = pneg %p33
        %p46 = pneg %p30
        %s47 = sand.u32 %s24, 1
        %s48 = scalar_lea.sflag [#allocation6], %s47
        %s49 = sand.u32 %s24, 1
        %s50 = smul.addr %s49, 8
        %s51 = scalar_lea.vmem [#allocation5], %s50
        %s52 = smul.u32 %s15, 8
        %s53 = sld [smem:[#allocation4 + %s52]]
        %p54 = scmp.gt.s32.totalorder %s53, 0
        %s55 = scalar_select %p54, %s53, 0
        %p56 = scmp.lt.s32.totalorder %s55, 63
        %s57 = scalar_select %p56, %s55, 63
        %s58 = smul.addr %s57, 16
        %s59 = scalar_lea.hbm %s1, %s58
        // Predicated region
        $region13: #{tpu_custom_call.1} parent=11 // pred_check
          _
        $region14: #{tpu_custom_call.1} parent=11 // pred_check_branch
          %61 = sbr.rel target = $region16
        $region15: #{tpu_custom_call.1} parent=11 // pred_region
          %62 = sst [smem:[#allocation9]] [#allocation8]
          %63 = sst [smem:[#allocation10]] [#allocation7]
        $region16: #{tpu_custom_call.1} parent=11 // pred_fallthru
          _
        %65 = shalt.err (0)
        %s67 = sshll.u32 %s51, 4
        %s68 = int_to_ptr.vmem [resolvable:$true] %s67
        %70 = dma.hbm_to_vmem [thread:$0]  %s59, 16, %s68, [#allocation2]
        %s71 = sadd.s32 %s52, 1
        %s72 = sld [smem:[#allocation4 + %s71]]
        %p73 = scmp.gt.s32.totalorder %s72, 0
        %s74 = scalar_select %p73, %s72, 0
        %p75 = scmp.lt.s32.totalorder %s74, 63
        %s76 = scalar_select %p75, %s74, 63
        %s77 = smul.addr %s76, 16
        %s78 = scalar_lea.hbm %s1, %s77
        %s79 = scalar_lea.vmem %s51, 1 [#allocation5]
        %s80 = scalar_lea.sflag [#allocation2], 1
        // Predicated region
        $region17: #{tpu_custom_call.1} parent=11 // pred_check
          _
        $region18: #{tpu_custom_call.1} parent=11 // pred_check_branch
          %82 = sbr.rel target = $region20
        $region19: #{tpu_custom_call.1} parent=11 // pred_region
          %83 = sst [smem:[#allocation9]] [#allocation12]
          %84 = sst [smem:[#allocation10]] [#allocation11]
        $region20: #{tpu_custom_call.1} parent=11 // pred_fallthru
          _
        %86 = shalt.err (0)
        %s88 = sshll.u32 %s79, 4
        %s89 = int_to_ptr.vmem [resolvable:$true] %s88
        %91 = dma.hbm_to_vmem [thread:$0]  %s78, 16, %s89, %s80
        %s92 = sadd.s32 %s52, 2
        %s93 = sld [smem:[#allocation4 + %s92]]
        %p94 = scmp.gt.s32.totalorder %s93, 0
        %s95 = scalar_select %p94, %s93, 0
        %p96 = scmp.lt.s32.totalorder %s95, 63
        %s97 = scalar_select %p96, %s95, 63
        %s98 = smul.addr %s97, 16
        %s99 = scalar_lea.hbm %s1, %s98
        %s100 = scalar_lea.vmem %s51, 2 [#allocation5]
        %s101 = scalar_lea.sflag [#allocation2], 2
        // Predicated region
        $region21: #{tpu_custom_call.1} parent=11 // pred_check
          _
        $region22: #{tpu_custom_call.1} parent=11 // pred_check_branch
          %103 = sbr.rel target = $region24
        $region23: #{tpu_custom_call.1} parent=11 // pred_region
          %104 = sst [smem:[#allocation9]] [#allocation14]
          %105 = sst [smem:[#allocation10]] [#allocation13]
        $region24: #{tpu_custom_call.1} parent=11 // pred_fallthru
          _
        %107 = shalt.err (0)
        %s109 = sshll.u32 %s100, 4
        %s110 = int_to_ptr.vmem [resolvable:$true] %s109
        %112 = dma.hbm_to_vmem [thread:$0]  %s99, 16, %s110, %s101
        %s113 = sadd.s32 %s52, 3
        %s114 = sld [smem:[#allocation4 + %s113]]
        %p115 = scmp.gt.s32.totalorder %s114, 0
        %s116 = scalar_select %p115, %s114, 0
        %p117 = scmp.lt.s32.totalorder %s116, 63
        %s118 = scalar_select %p117, %s116, 63
        %s119 = smul.addr %s118, 16
        %s120 = scalar_lea.hbm %s1, %s119
        %s121 = scalar_lea.vmem %s51, 3 [#allocation5]
        %s122 = scalar_lea.sflag [#allocation2], 3
        // Predicated region
        $region25: #{tpu_custom_call.1} parent=11 // pred_check
          _
        $region26: #{tpu_custom_call.1} parent=11 // pred_check_branch
          %124 = sbr.rel target = $region28
        $region27: #{tpu_custom_call.1} parent=11 // pred_region
          %125 = sst [smem:[#allocation9]] [#allocation16]
          %126 = sst [smem:[#allocation10]] [#allocation15]
        $region28: #{tpu_custom_call.1} parent=11 // pred_fallthru
          _
        %128 = shalt.err (0)
        %s130 = sshll.u32 %s121, 4
        %s131 = int_to_ptr.vmem [resolvable:$true] %s130
        %133 = dma.hbm_to_vmem [thread:$0]  %s120, 16, %s131, %s122
        %s134 = sadd.s32 %s52, 4
        %s135 = sld [smem:[#allocation4 + %s134]]
        %p136 = scmp.gt.s32.totalorder %s135, 0
        %s137 = scalar_select %p136, %s135, 0
        %p138 = scmp.lt.s32.totalorder %s137, 63
        %s139 = scalar_select %p138, %s137, 63
        %s140 = smul.addr %s139, 16
        %s141 = scalar_lea.hbm %s1, %s140
        %s142 = scalar_lea.vmem %s51, 4 [#allocation5]
        %s143 = scalar_lea.sflag [#allocation2], 4
        // Predicated region
        $region29: #{tpu_custom_call.1} parent=11 // pred_check
          _
        $region30: #{tpu_custom_call.1} parent=11 // pred_check_branch
          %145 = sbr.rel target = $region32
        $region31: #{tpu_custom_call.1} parent=11 // pred_region
          %146 = sst [smem:[#allocation9]] [#allocation18]
          %147 = sst [smem:[#allocation10]] [#allocation17]
        $region32: #{tpu_custom_call.1} parent=11 // pred_fallthru
          _
        %149 = shalt.err (0)
        %s151 = sshll.u32 %s142, 4
        %s152 = int_to_ptr.vmem [resolvable:$true] %s151
        %154 = dma.hbm_to_vmem [thread:$0]  %s141, 16, %s152, %s143
        %s155 = sadd.s32 %s52, 5
        %s156 = sld [smem:[#allocation4 + %s155]]
        %p157 = scmp.gt.s32.totalorder %s156, 0
        %s158 = scalar_select %p157, %s156, 0
        %p159 = scmp.lt.s32.totalorder %s158, 63
        %s160 = scalar_select %p159, %s158, 63
        %s161 = smul.addr %s160, 16
        %s162 = scalar_lea.hbm %s1, %s161
        %s163 = scalar_lea.vmem %s51, 5 [#allocation5]
        %s164 = scalar_lea.sflag [#allocation2], 5
        // Predicated region
        $region33: #{tpu_custom_call.1} parent=11 // pred_check
          _
        $region34: #{tpu_custom_call.1} parent=11 // pred_check_branch
          %166 = sbr.rel target = $region36
        $region35: #{tpu_custom_call.1} parent=11 // pred_region
          %167 = sst [smem:[#allocation9]] [#allocation20]
          %168 = sst [smem:[#allocation10]] [#allocation19]
        $region36: #{tpu_custom_call.1} parent=11 // pred_fallthru
          _
        %170 = shalt.err (0)
        %s172 = sshll.u32 %s163, 4
        %s173 = int_to_ptr.vmem [resolvable:$true] %s172
        %175 = dma.hbm_to_vmem [thread:$0]  %s162, 16, %s173, %s164
        %s176 = sadd.s32 %s52, 6
        %s177 = sld [smem:[#allocation4 + %s176]]
        %p178 = scmp.gt.s32.totalorder %s177, 0
        %s179 = scalar_select %p178, %s177, 0
        %p180 = scmp.lt.s32.totalorder %s179, 63
        %s181 = scalar_select %p180, %s179, 63
        %s182 = smul.addr %s181, 16
        %s183 = scalar_lea.hbm %s1, %s182
        %s184 = scalar_lea.vmem %s51, 6 [#allocation5]
        %s185 = scalar_lea.sflag [#allocation2], 6
        // Predicated region
        $region37: #{tpu_custom_call.1} parent=11 // pred_check
          _
        $region38: #{tpu_custom_call.1} parent=11 // pred_check_branch
          %187 = sbr.rel target = $region40
        $region39: #{tpu_custom_call.1} parent=11 // pred_region
          %188 = sst [smem:[#allocation9]] [#allocation22]
          %189 = sst [smem:[#allocation10]] [#allocation21]
        $region40: #{tpu_custom_call.1} parent=11 // pred_fallthru
          _
        %191 = shalt.err (0)
        %s193 = sshll.u32 %s184, 4
        %s194 = int_to_ptr.vmem [resolvable:$true] %s193
        %196 = dma.hbm_to_vmem [thread:$0]  %s183, 16, %s194, %s185
        %s197 = sadd.s32 %s52, 7
        %s198 = sld [smem:[#allocation4 + %s197]]
        %p199 = scmp.gt.s32.totalorder %s198, 0
        %s200 = scalar_select %p199, %s198, 0
        %p201 = scmp.lt.s32.totalorder %s200, 63
        %s202 = scalar_select %p201, %s200, 63
        %s203 = smul.addr %s202, 16
        %s204 = scalar_lea.hbm %s1, %s203
        %s205 = scalar_lea.vmem %s51, 7 [#allocation5]
        %s206 = scalar_lea.sflag [#allocation2], 7
        // Predicated region
        $region41: #{tpu_custom_call.1} parent=11 // pred_check
          _
        $region42: #{tpu_custom_call.1} parent=11 // pred_check_branch
          %208 = sbr.rel target = $region44
        $region43: #{tpu_custom_call.1} parent=11 // pred_region
          %209 = sst [smem:[#allocation9]] [#allocation24]
          %210 = sst [smem:[#allocation10]] [#allocation23]
        $region44: #{tpu_custom_call.1} parent=11 // pred_fallthru
          _
        %212 = shalt.err (0)
        %s214 = sshll.u32 %s205, 4
        %s215 = int_to_ptr.vmem [resolvable:$true] %s214
        %217 = dma.hbm_to_vmem [thread:$0]  %s204, 16, %s215, %s206
        loop: start=0, step=1, limit=8
        $region45: #{tpu_custom_call.1} parent=11 // loop_pre_header
          _
        $region46: #{tpu_custom_call.1} parent=11 // loop_header
          %s219 = sphi 0, %s223
          %p220 = scmp.ge.s32.totalorder %s219, 8
        $region47: #{tpu_custom_call.1} parent=11 // loop_header_branch
          %222 = sbr.rel (%p220) target = $region51
        $region48: #{tpu_custom_call.1} parent=11 // loop_body
          %s224 = sand.u32 %s219, 7
          %s225 = scalar_lea.sflag [#allocation2], %s224
          %s226 = smul.u32 1, 1
          %s227 = sshll.u32 %s226, 4
          %228 = dma.done %s225, %s227
          %s229 = sadd.s32 %s219, 8
          %p230 = scmp.lt.s32.totalorder %s229, 8
          // Predicated region
          $region52: #{tpu_custom_call.1} parent=48 // pred_check
            %p231 = pneg %p230
          $region53: #{tpu_custom_call.1} parent=48 // pred_check_branch
            %233 = sbr.rel (%p231) target = $region55
          $region54: #{tpu_custom_call.1} parent=48 // pred_region
            %s234 = sadd.s32 %s52, %s229
            %s235 = sld [smem:[#allocation4 + %s234]]
            %p236 = scmp.gt.s32.totalorder %s235, 0
            %s237 = scalar_select %p236, %s235, 0
            %p238 = scmp.lt.s32.totalorder %s237, 63
            %s239 = scalar_select %p238, %s237, 63
            %s240 = smul.addr %s239, 16
            %s241 = scalar_lea.hbm %s1, %s240
            %s242 = scalar_lea.vmem %s51, %s229 [#allocation5]
            // Predicated region
            $region56: #{tpu_custom_call.1} parent=54 // pred_check
              _
            $region57: #{tpu_custom_call.1} parent=54 // pred_check_branch
              %244 = sbr.rel target = $region59
            $region58: #{tpu_custom_call.1} parent=54 // pred_region
              %245 = sst [smem:[#allocation9]] [#allocation26]
              %246 = sst [smem:[#allocation10]] [#allocation25]
            $region59: #{tpu_custom_call.1} parent=54 // pred_fallthru
              _
            %248 = shalt.err (0)
            %s250 = sshll.u32 %s242, 4
            %s251 = int_to_ptr.vmem [resolvable:$true] %s250
            %253 = dma.hbm_to_vmem [thread:$0]  %s241, 16, %s251, %s225
          $region55: #{tpu_custom_call.1} parent=48 // pred_fallthru
            _
        $region49: #{tpu_custom_call.1} parent=11 // loop_footer
          %s223 = sadd.s32 1, %s219
        $region50: #{tpu_custom_call.1} parent=11 // loop_footer_branch
          %218 = sbr.rel target = $region46
        $region51: #{tpu_custom_call.1} parent=11 // loop_exit
          _
        %s254 = sand.u32 %s24, 1
        %s255 = scalar_lea.sflag [#allocation6], %s254
        %s256 = sand.u32 %s24, 1
        %s257 = smul.addr %s256, 8
        %s258 = scalar_lea.vmem [#allocation5], %s257
        // Predicated region
        $region60: #{tpu_custom_call.1} parent=11 // pred_check
          %p259 = pneg %p30
        $region61: #{tpu_custom_call.1} parent=11 // pred_check_branch
          %261 = sbr.rel (%p259) target = $region63
        $region62: #{tpu_custom_call.1} parent=11 // pred_region
          %s263 = ssub.s32 128, 128
          %264 = vsyncadd %s255, %s263
          %s265 = smul.addr %s15, 128
          %s266 = scalar_lea.hbm %s2, %s265
          %s268 = sshll.u32 %s258, 4
          %s269 = int_to_ptr.vmem [resolvable:$true] %s268
          %271 = dma.vmem_to_hbm [thread:$0]  %s269, 128, %s266, %s255
        $region63: #{tpu_custom_call.1} parent=11 // pred_fallthru
          _
      $region12: #{tpu_custom_call.1} parent=5 // pred_fallthru
        _
      %p272 = scmp.le.s32.totalorder 1, %s15
      // Predicated region
      $region64: #{tpu_custom_call.1} parent=5 // pred_check
        %p273 = pneg %p272
      $region65: #{tpu_custom_call.1} parent=5 // pred_check_branch
        %275 = sbr.rel (%p273) target = $region67
      $region66: #{tpu_custom_call.1} parent=5 // pred_region
        %s276 = ssub.s32 %s15, 1
        // Predicated region
        $region68: #{tpu_custom_call.1} parent=66 // pred_check
          %p277 = pneg %p36
        $region69: #{tpu_custom_call.1} parent=66 // pred_check_branch
          %279 = sbr.rel (%p277) target = $region71
        $region70: #{tpu_custom_call.1} parent=66 // pred_region
          %s280 = sand.u32 %s27, 1
          %s281 = scalar_lea.sflag [#allocation6], %s280
          %s282 = sand.u32 %s27, 1
          %s283 = smul.addr %s282, 8
          %s284 = scalar_lea.vmem [#allocation5], %s283
          %285 = dma.done %s281, 128
        $region71: #{tpu_custom_call.1} parent=66 // pred_fallthru
          _
      $region67: #{tpu_custom_call.1} parent=5 // pred_fallthru
        _
    $region6: #{tpu_custom_call.1} parent=1 // loop_footer
      %s19 = sadd.s32 1, %s15
    $region7: #{tpu_custom_call.1} parent=1 // loop_footer_branch
      %14 = sbr.rel target = $region3
    $region8: #{tpu_custom_call.1} parent=1 // loop_exit
      _
    %286 = vsyncpa [#allocation6], 1
    %s287 = scalar_lea.sflag [#allocation6], 1
    %288 = vsyncpa %s287, 1
  %289 = vsyncmov [#allocation2]
  %s290 = vpop.sfrf %289
  %p291 = scmp.eq.s32.totalorder %s290, 0
  %p292 = pneg %p291
  %294 = shalt.err (%p292)
  %s295 = scalar_lea.sflag [#allocation2], 1
  %296 = vsyncmov %s295
  %s297 = vpop.sfrf %296
  %p298 = scmp.eq.s32.totalorder %s297, 0
  %p299 = pneg %p298
  %301 = shalt.err (%p299)
  %s302 = scalar_lea.sflag [#allocation2], 2
  %303 = vsyncmov %s302
  %s304 = vpop.sfrf %303
  %p305 = scmp.eq.s32.totalorder %s304, 0
  %p306 = pneg %p305
  %308 = shalt.err (%p306)
  %s309 = scalar_lea.sflag [#allocation2], 3
  %310 = vsyncmov %s309
  %s311 = vpop.sfrf %310
  %p312 = scmp.eq.s32.totalorder %s311, 0
  %p313 = pneg %p312
  %315 = shalt.err (%p313)
  %s316 = scalar_lea.sflag [#allocation2], 4
  %317 = vsyncmov %s316
  %s318 = vpop.sfrf %317
  %p319 = scmp.eq.s32.totalorder %s318, 0
  %p320 = pneg %p319
  %322 = shalt.err (%p320)
  %s323 = scalar_lea.sflag [#allocation2], 5
  %324 = vsyncmov %s323
  %s325 = vpop.sfrf %324
  %p326 = scmp.eq.s32.totalorder %s325, 0
  %p327 = pneg %p326
  %329 = shalt.err (%p327)
  %s330 = scalar_lea.sflag [#allocation2], 6
  %331 = vsyncmov %s330
  %s332 = vpop.sfrf %331
  %p333 = scmp.eq.s32.totalorder %s332, 0
  %p334 = pneg %p333
  %336 = shalt.err (%p334)
  %s337 = scalar_lea.sflag [#allocation2], 7
  %338 = vsyncmov %s337
  %s339 = vpop.sfrf %338
  %p340 = scmp.eq.s32.totalorder %s339, 0
  %p341 = pneg %p340
  %343 = shalt.err (%p341)

</llo_original>
